<compile_context>
chip_gen: v6e
topology: v6e:2x2x1
jax: 0.10.0
libtpu: 0.0.40
codegen_flags: <defaults>
</compile_context>

<pallas_src>
import numpy as np
import jax
import jax.numpy as jnp
from jax.experimental import pallas as pl
from jax.experimental.pallas import tpu as pltpu

BN_EPS = 1e-5
_VMEM_BUDGET = 40 << 20   # per-tile buffer budget: fits v7x 64 MiB, v5e/v6e 128 MiB
_VMEM_LIMIT = 48 << 20    # explicit scoped-VMEM limit (> v5e's 16 MiB default)


# ---------------------------------------------------------------------------
# Fused kernel: BN (folded) + hardswish + 2x2 avg-pool + 1x1 conv
# ---------------------------------------------------------------------------
def _transition_kernel(x_ref, scale_ref, shift_ref, w_ref, o_ref):
    # x:     (4, Cin, tp)  -- 4 = 2x2 pooling taps, lane dim = flattened N*Ho*Wo
    # scale: (Cin, 1)  shift: (Cin, 1)   (eval-mode BatchNorm folded to affine)
    # w:     (Cout, Cin) bf16            (1x1 conv, no bias)
    # o:     (Cout, tp)                  lane-dense, channel-major
    cin, tp = x_ref.shape[1], x_ref.shape[2]

    # Hoist lane-splats out of the unrolled tap loop (no CSE of broadcast_in_dim).
    scale_b = jnp.broadcast_to(scale_ref[...], (cin, tp))
    shift_b = jnp.broadcast_to(shift_ref[...], (cin, tp))

    acc = None
    for t in range(4):                         # unrolled 2x2 pooling taps
        h = x_ref[t] * scale_b + shift_b       # BatchNorm (running stats)
        g = h * jnp.clip(h + 3.0, 0.0, 6.0)    # hardswish numerator x*relu6(x+3)
        acc = g if acc is None else acc + g    # init from first tap (no zeros)
    # Fold hardswish's 1/6 and the 2x2 avg-pool's 1/4 into one multiply.
    pooled = acc * (1.0 / 24.0)

    # 1x1 conv == channel matmul: bf16 operands (MXU native), f32 accumulate.
    o_ref[...] = jnp.dot(w_ref[...], pooled.astype(jnp.bfloat16),
                         preferred_element_type=jnp.float32).astype(o_ref.dtype)


# ---------------------------------------------------------------------------
# Tile selection (lane-dense, VMEM-budget aware)
# ---------------------------------------------------------------------------
def _vmem_bytes(tp, cin, cout):
    return ((2 * 4 * cin * tp * 4)       # double-buffered f32 input taps
            + (2 * cout * tp * 4)        # double-buffered f32 output
            + (2 * cout * cin * 2)       # double-buffered bf16 weight
            + (2 * 2 * cin * 4))         # scale / shift


def _choose_lane_tile(L, cin, cout):
    """Largest lane tile in {128..2048} (multiple of 128) that fits the VMEM
    budget and keeps lane padding under ~12.5% of the padded extent."""
    tile = 128
    for tp in (256, 512, 1024, 2048):
        if _vmem_bytes(tp, cin, cout) > _VMEM_BUDGET:
            break
        padded = pl.cdiv(L, tp) * tp
        if padded - L > padded // 8:
            break
        tile = tp
    return tile


# ---------------------------------------------------------------------------
# Wrapper
# ---------------------------------------------------------------------------
def transition_layer(x_nchw, params):
    """x_nchw: (N, Cin, H, W) float32 -> (N, Cout, H//2, W//2) float32."""
    N, Cin, H, W = x_nchw.shape
    assert H % 2 == 0 and W % 2 == 0, "AvgPool2d(2,2) needs even spatial dims"
    Ho, Wo = H // 2, W // 2
    L = N * Ho * Wo                              # flattened lane extent
    Cout = params["w"].shape[0]

    # Expose the four 2x2-pool taps as a leading axis and flatten the batch
    # into the lane axis: (N,Cin,H,W) -> (4, Cin, N*Ho*Wo).  Single layout pass.
    # TODO(synk): try CompilerParams(allow_input_fusion=...) so XLA fuses this
    # transpose into the pallas input DMA instead of materializing it in HBM.
    xt = x_nchw.reshape(N, Cin, Ho, 2, Wo, 2)
    xt = jnp.transpose(xt, (3, 5, 1, 0, 2, 4)).reshape(4, Cin, L)

    tile = _choose_lane_tile(L, Cin, Cout)
    Lp = pl.cdiv(L, tile) * tile
    if Lp != L:                                  # keep stores lane-dense (>=128)
        xt = jnp.pad(xt, ((0, 0), (0, 0), (0, Lp - L)))

    w_bf16 = params["w"].astype(jnp.bfloat16)

    cost = pl.CostEstimate(
        flops=2 * Cout * Cin * Lp + 28 * Cin * Lp,
        transcendentals=0,
        bytes_accessed=(4 * 4 * Cin * Lp) + (4 * Cout * Lp)
                       + (2 * Cout * Cin) + (2 * Cin * 4 * 2),
    )

    out = pl.pallas_call(
        _transition_kernel,
        out_shape=jax.ShapeDtypeStruct((Cout, Lp), x_nchw.dtype),
        grid=(Lp // tile,),
        in_specs=[
            pl.BlockSpec((4, Cin, tile), lambda p: (0, 0, p)),
            pl.BlockSpec((Cin, 1), lambda p: (0, 0)),
            pl.BlockSpec((Cin, 1), lambda p: (0, 0)),
            pl.BlockSpec((Cout, Cin), lambda p: (0, 0)),
        ],
        out_specs=pl.BlockSpec((Cout, tile), lambda p: (0, p)),
        compiler_params=pltpu.CompilerParams(
            dimension_semantics=("parallel",),
            vmem_limit_bytes=_VMEM_LIMIT),
        cost_estimate=cost,
    )(xt, params["scale"], params["shift"], w_bf16)

    # (Cout, N*P) -> (N, Cout, Ho, Wo): drop lane padding, un-flatten batch.
    out = out[:, :L].reshape(Cout, N, Ho, Wo)
    return jnp.transpose(out, (1, 0, 2, 3))


# ---------------------------------------------------------------------------
# Deterministic synthetic parameters (BN stats folded into scale/shift)
# ---------------------------------------------------------------------------
def init_params(key, in_channels, out_channels):
    kw, kg, kb, km, kv = jax.random.split(key, 5)
    gamma = jax.random.uniform(kg, (in_channels,), jnp.float32, 0.5, 1.5)
    beta = jax.random.normal(kb, (in_channels,), jnp.float32) * 0.1
    mean = jax.random.normal(km, (in_channels,), jnp.float32) * 0.1
    var = jax.random.uniform(kv, (in_channels,), jnp.float32, 0.5, 1.5)
    scale = gamma / jnp.sqrt(var + BN_EPS)
    shift = beta - mean * scale
    w = jax.random.normal(kw, (out_channels, in_channels), jnp.float32) * 0.1
    return {
        "w": w,                                   # (Cout, Cin), 1x1 conv, no bias
        "scale": scale.reshape(in_channels, 1),   # per-channel BN scale
        "shift": shift.reshape(in_channels, 1),   # per-channel BN shift
    }


# ---------------------------------------------------------------------------
# Independent pure-JAX reference (exact PyTorch op order) for correctness
# ---------------------------------------------------------------------------
def reference(x_nchw, params):
    scale = params["scale"].reshape(1, -1, 1, 1)
    shift = params["shift"].reshape(1, -1, 1, 1)
    h = x_nchw * scale + shift                               # BatchNorm (eval)
    h = h * jnp.clip(h + 3.0, 0.0, 6.0) / 6.0                # hardswish
    y = jnp.einsum("oc,nchw->nohw", params["w"], h)          # 1x1 conv, no bias
    N, Co, H, W = y.shape
    return y.reshape(N, Co, H // 2, 2, W // 2, 2).mean(axis=(3, 5))  # avg pool


if __name__ == "__main__":
    in_channels, out_channels = 8, 16
    key = jax.random.PRNGKey(0)
    kx, kp = jax.random.split(key)
    x = jax.random.normal(kx, (2, in_channels, 16, 16), jnp.float32)  # NCHW
    params = init_params(kp, in_channels, out_channels)

    fwd = jax.jit(transition_layer)
    out = jax.block_until_ready(fwd(x, params))
    assert out.shape == (2, out_channels, 8, 8), out.shape

    ref = reference(x, params)
    np.testing.assert_allclose(np.asarray(out), np.asarray(ref),
                               rtol=1e-2, atol=1e-2)
    print("KERNEL_OK")
</pallas_src>

<mosaic_0001>
module attributes {stable_mosaic.version = 11 : i64} {
  func.func @_transition_kernel(%arg0: i32, %arg1: memref<4x8x128xf32, #tpu.memory_space<vmem>>, %arg2: memref<8x1xf32, #tpu.memory_space<vmem>>, %arg3: memref<8x1xf32, #tpu.memory_space<vmem>>, %arg4: memref<16x8xbf16, #tpu.memory_space<vmem>>, %arg5: memref<16x128xf32, #tpu.memory_space<vmem>>) attributes {dimension_semantics = [#tpu.dimension_semantics<parallel>], iteration_bounds = array<i64: 1>, scalar_prefetch = 0 : i64, scratch_operands = 0 : i64, tpu.core_type = #tpu.core_type<tc>, window_params = [{transform_indices = @transform_0, window_bounds = array<i64: 4, 8, 128>}, {pipeline_mode = #tpu.pipeline_mode<synchronous>, transform_indices = @transform_1, window_bounds = array<i64: 8, 1>}, {pipeline_mode = #tpu.pipeline_mode<synchronous>, transform_indices = @transform_2, window_bounds = array<i64: 8, 1>}, {pipeline_mode = #tpu.pipeline_mode<synchronous>, transform_indices = @transform_3, window_bounds = array<i64: 16, 8>}, {transform_indices = @transform_4, window_bounds = array<i64: 16, 128>}]} {
    %c0 = arith.constant 0 : index
    %c0_0 = arith.constant 0 : index
    %0 = vector.load %arg2[%c0, %c0_0] : memref<8x1xf32, #tpu.memory_space<vmem>>, vector<8x1xf32>
    %1 = vector.shape_cast %0 : vector<8x1xf32> to vector<8x1xf32>
    %2 = vector.broadcast %1 : vector<8x1xf32> to vector<8x128xf32>
    %c0_1 = arith.constant 0 : index
    %c0_2 = arith.constant 0 : index
    %3 = vector.load %arg3[%c0_1, %c0_2] : memref<8x1xf32, #tpu.memory_space<vmem>>, vector<8x1xf32>
    %4 = vector.shape_cast %3 : vector<8x1xf32> to vector<8x1xf32>
    %5 = vector.broadcast %4 : vector<8x1xf32> to vector<8x128xf32>
    %c0_3 = arith.constant 0 : index
    %c0_4 = arith.constant 0 : index
    %c0_5 = arith.constant 0 : index
    %6 = vector.load %arg1[%c0_3, %c0_4, %c0_5] : memref<4x8x128xf32, #tpu.memory_space<vmem>>, vector<1x8x128xf32>
    %7 = vector.shape_cast %6 : vector<1x8x128xf32> to vector<8x128xf32>
    %8 = arith.mulf %7, %2 : vector<8x128xf32>
    %9 = arith.addf %8, %5 : vector<8x128xf32>
    %cst = arith.constant 3.000000e+00 : f32
    %10 = vector.broadcast %cst : f32 to vector<8x128xf32>
    %11 = arith.addf %9, %10 : vector<8x128xf32>
    %cst_6 = arith.constant 0.000000e+00 : f32
    %cst_7 = arith.constant 6.000000e+00 : f32
    %12 = vector.broadcast %cst_6 : f32 to vector<8x128xf32>
    %13 = arith.maximumf %12, %11 : vector<8x128xf32>
    %14 = vector.broadcast %cst_7 : f32 to vector<8x128xf32>
    %15 = arith.minimumf %14, %13 : vector<8x128xf32>
    %16 = arith.mulf %9, %15 : vector<8x128xf32>
    %c1 = arith.constant 1 : index
    %c0_8 = arith.constant 0 : index
    %c0_9 = arith.constant 0 : index
    %17 = vector.load %arg1[%c1, %c0_8, %c0_9] : memref<4x8x128xf32, #tpu.memory_space<vmem>>, vector<1x8x128xf32>
    %18 = vector.shape_cast %17 : vector<1x8x128xf32> to vector<8x128xf32>
    %19 = arith.mulf %18, %2 : vector<8x128xf32>
    %20 = arith.addf %19, %5 : vector<8x128xf32>
    %cst_10 = arith.constant 3.000000e+00 : f32
    %21 = vector.broadcast %cst_10 : f32 to vector<8x128xf32>
    %22 = arith.addf %20, %21 : vector<8x128xf32>
    %cst_11 = arith.constant 0.000000e+00 : f32
    %cst_12 = arith.constant 6.000000e+00 : f32
    %23 = vector.broadcast %cst_11 : f32 to vector<8x128xf32>
    %24 = arith.maximumf %23, %22 : vector<8x128xf32>
    %25 = vector.broadcast %cst_12 : f32 to vector<8x128xf32>
    %26 = arith.minimumf %25, %24 : vector<8x128xf32>
    %27 = arith.mulf %20, %26 : vector<8x128xf32>
    %28 = arith.addf %16, %27 : vector<8x128xf32>
    %c2 = arith.constant 2 : index
    %c0_13 = arith.constant 0 : index
    %c0_14 = arith.constant 0 : index
    %29 = vector.load %arg1[%c2, %c0_13, %c0_14] : memref<4x8x128xf32, #tpu.memory_space<vmem>>, vector<1x8x128xf32>
    %30 = vector.shape_cast %29 : vector<1x8x128xf32> to vector<8x128xf32>
    %31 = arith.mulf %30, %2 : vector<8x128xf32>
    %32 = arith.addf %31, %5 : vector<8x128xf32>
    %cst_15 = arith.constant 3.000000e+00 : f32
    %33 = vector.broadcast %cst_15 : f32 to vector<8x128xf32>
    %34 = arith.addf %32, %33 : vector<8x128xf32>
    %cst_16 = arith.constant 0.000000e+00 : f32
    %cst_17 = arith.constant 6.000000e+00 : f32
    %35 = vector.broadcast %cst_16 : f32 to vector<8x128xf32>
    %36 = arith.maximumf %35, %34 : vector<8x128xf32>
    %37 = vector.broadcast %cst_17 : f32 to vector<8x128xf32>
    %38 = arith.minimumf %37, %36 : vector<8x128xf32>
    %39 = arith.mulf %32, %38 : vector<8x128xf32>
    %40 = arith.addf %28, %39 : vector<8x128xf32>
    %c3 = arith.constant 3 : index
    %c0_18 = arith.constant 0 : index
    %c0_19 = arith.constant 0 : index
    %41 = vector.load %arg1[%c3, %c0_18, %c0_19] : memref<4x8x128xf32, #tpu.memory_space<vmem>>, vector<1x8x128xf32>
    %42 = vector.shape_cast %41 : vector<1x8x128xf32> to vector<8x128xf32>
    %43 = arith.mulf %42, %2 : vector<8x128xf32>
    %44 = arith.addf %43, %5 : vector<8x128xf32>
    %cst_20 = arith.constant 3.000000e+00 : f32
    %45 = vector.broadcast %cst_20 : f32 to vector<8x128xf32>
    %46 = arith.addf %44, %45 : vector<8x128xf32>
    %cst_21 = arith.constant 0.000000e+00 : f32
    %cst_22 = arith.constant 6.000000e+00 : f32
    %47 = vector.broadcast %cst_21 : f32 to vector<8x128xf32>
    %48 = arith.maximumf %47, %46 : vector<8x128xf32>
    %49 = vector.broadcast %cst_22 : f32 to vector<8x128xf32>
    %50 = arith.minimumf %49, %48 : vector<8x128xf32>
    %51 = arith.mulf %44, %50 : vector<8x128xf32>
    %52 = arith.addf %40, %51 : vector<8x128xf32>
    %cst_23 = arith.constant 0.0416666679 : f32
    %53 = vector.broadcast %cst_23 : f32 to vector<8x128xf32>
    %54 = arith.mulf %52, %53 : vector<8x128xf32>
    %c0_24 = arith.constant 0 : index
    %c0_25 = arith.constant 0 : index
    %55 = vector.load %arg4[%c0_24, %c0_25] : memref<16x8xbf16, #tpu.memory_space<vmem>>, vector<16x8xbf16>
    %56 = arith.truncf %54 : vector<8x128xf32> to vector<8x128xbf16>
    %cst_26 = arith.constant dense<0.000000e+00> : vector<16x128xf32>
    %57 = tpu.matmul %55, %56, %cst_26 {dimension_numbers = #tpu.dot_dimension_numbers<[1], [0], [0], [1], [0, 0, 1, 1], [], []>} : vector<16x8xbf16>, vector<8x128xbf16>, vector<16x128xf32> -> vector<16x128xf32>
    %c0_27 = arith.constant 0 : index
    %c0_28 = arith.constant 0 : index
    %58 = vector.load %arg5[%c0_27, %c0_28] : memref<16x128xf32, #tpu.memory_space<vmem>>, vector<16x128xf32>
    tpu.vector_store %arg5[%c0_27, %c0_28], %57 {strides = array<i32>} : memref<16x128xf32, #tpu.memory_space<vmem>>, vector<16x128xf32>,
    return
  }
  func.func @transform_0(%arg0: i32) -> (i32, i32, i32) {
    %c0_i32 = arith.constant 0 : i32
    %c0_i32_0 = arith.constant 0 : i32
    %c0_i32_1 = arith.constant 0 : i32
    return %c0_i32, %c0_i32_0, %arg0 : i32, i32, i32
  }
  func.func @transform_1(%arg0: i32) -> (i32, i32) {
    %c0_i32 = arith.constant 0 : i32
    %c0_i32_0 = arith.constant 0 : i32
    %c0_i32_1 = arith.constant 0 : i32
    return %c0_i32, %c0_i32_0 : i32, i32
  }
  func.func @transform_2(%arg0: i32) -> (i32, i32) {
    %c0_i32 = arith.constant 0 : i32
    %c0_i32_0 = arith.constant 0 : i32
    %c0_i32_1 = arith.constant 0 : i32
    return %c0_i32, %c0_i32_0 : i32, i32
  }
  func.func @transform_3(%arg0: i32) -> (i32, i32) {
    %c0_i32 = arith.constant 0 : i32
    %c0_i32_0 = arith.constant 0 : i32
    %c0_i32_1 = arith.constant 0 : i32
    return %c0_i32, %c0_i32_0 : i32, i32
  }
  func.func @transform_4(%arg0: i32) -> (i32, i32) {
    %c0_i32 = arith.constant 0 : i32
    %c0_i32_0 = arith.constant 0 : i32
    return %c0_i32, %arg0 : i32, i32
  }
}

</mosaic_0001>

<llo_original>
// kernel: transition_layer.1
$region0: #{transition_layer.1}
  #allocation0 [shape = 'u32[]', space=smem, size = 0x4, offset = 0x4, fixed_abs, tag = 'smem constant byte address 0x4 - core index']
  #allocation1 [shape = 'u32[144,128]{1,0:T(1,128)}', space=vmem, size = 0x12000, scoped, tag = 'internal scratch']
  %s0 = inlined_call_operand.vmem [shape: f32[4,8,128], index: 0, kind: input, shape index: {}]
  %s1 = inlined_call_operand.vmem [shape: f32[8,1], index: 1, kind: input, shape index: {}]
  %s2 = inlined_call_operand.vmem [shape: f32[8,1], index: 2, kind: input, shape index: {}]
  %s3 = inlined_call_operand.vmem [shape: bf16[16,8], index: 3, kind: input, shape index: {}]
  %s4 = inlined_call_operand.vmem [shape: f32[16,128], index: 4, kind: output, shape index: {}]
  %s5 = sld [smem:[#allocation0]]
  $region26: #{transition_layer.1} parent=0
    _
  %s7 = ssub.s32 1, %s5
  %s8 = scalar_select 0, %s7, %s5
  // Predicated region
  $region2: #{transition_layer.1} parent=0 // pred_check
    _
  $region3: #{transition_layer.1} parent=0 // pred_check_branch
    %10 = sbr.rel (0) target = $region5
  $region4: #{transition_layer.1} parent=0 // pred_region
    _
  $region5: #{transition_layer.1} parent=0 // pred_fallthru
    _
  // Predicated region
  $region6: #{transition_layer.1} parent=0 // pred_check
    _
  $region7: #{transition_layer.1} parent=0 // pred_check_branch
    %12 = sbr.rel (0) target = $region9
  $region8: #{transition_layer.1} parent=0 // pred_region
    _
  $region9: #{transition_layer.1} parent=0 // pred_fallthru
    _
  // Predicated region
  $region10: #{transition_layer.1} parent=0 // pred_check
    _
  $region11: #{transition_layer.1} parent=0 // pred_check_branch
    %14 = sbr.rel (0) target = $region13
  $region12: #{transition_layer.1} parent=0 // pred_region
    _
  $region13: #{transition_layer.1} parent=0 // pred_fallthru
    _
  // Predicated region
  $region14: #{transition_layer.1} parent=0 // pred_check
    _
  $region15: #{transition_layer.1} parent=0 // pred_check_branch
    %16 = sbr.rel (0) target = $region17
  $region16: #{transition_layer.1} parent=0 // pred_region
    _
  $region17: #{transition_layer.1} parent=0 // pred_fallthru
    _
  %v18 = vld [vmem:[%s1] sm:$0xff]
  %20 = vset.pattern.permute.xlu0 0
  %21 = vperm.xlu0 %20, %v18
  %v22 = vpop.permute.xlu0 %21
  %v24 = vld [vmem:[%s2] sm:$0xff]
  %26 = vset.pattern.permute.xlu0 0
  %27 = vperm.xlu0 %26, %v24
  %v28 = vpop.permute.xlu0 %27
  %v30 = vld [vmem:[%s0] sm:$0xff]
  %v31 = vmul.f32 %v30, %v22
  %v32 = vadd.f32 %v31, %v28
  %v33 = vadd.f32 %v32, 3.0
  %v34 = vmax.f32 %v33, 0.0
  %v35 = vmin.f32 %v34, 6.0
  %v36 = vmul.f32 %v32, %v35
  %s37 = scalar_lea.vmem %s0, 8
  %v38 = vld [vmem:[%s37] sm:$0xff]
  %v39 = vmul.f32 %v38, %v22
  %v40 = vadd.f32 %v39, %v28
  %v41 = vadd.f32 %v40, 3.0
  %v42 = vmax.f32 %v41, 0.0
  %v43 = vmin.f32 %v42, 6.0
  %v44 = vmul.f32 %v40, %v43
  %v45 = vadd.f32 %v36, %v44
  %s46 = scalar_lea.vmem %s0, 16
  %v47 = vld [vmem:[%s46] sm:$0xff]
  %v48 = vmul.f32 %v47, %v22
  %v49 = vadd.f32 %v48, %v28
  %v50 = vadd.f32 %v49, 3.0
  %v51 = vmax.f32 %v50, 0.0
  %v52 = vmin.f32 %v51, 6.0
  %v53 = vmul.f32 %v49, %v52
  %v54 = vadd.f32 %v45, %v53
  %s55 = scalar_lea.vmem %s0, 24
  %v56 = vld [vmem:[%s55] sm:$0xff]
  %v57 = vmul.f32 %v56, %v22
  %v58 = vadd.f32 %v57, %v28
  %v59 = vadd.f32 %v58, 3.0
  %v60 = vmax.f32 %v59, 0.0
  %v61 = vmin.f32 %v60, 6.0
  %v62 = vmul.f32 %v58, %v61
  %v63 = vadd.f32 %v54, %v62
  %v64 = vmul.f32 %v63, 0.041666668
  %v65 = vld [vmem:[%s3] sm:$0xf]
  %v66 = vld [vmem:[%s3 + $0x4] sm:$0xf]
  %v67 = vpack.c.bf16 %v64, %v64
  %v70 = vunpack.c.l.b16 %v65
  %v71 = vunpack.c.l.b16 %v66
  %v72 = vpack.c.b16 %v71, %v70
  %vm73 = vcmask 64512
  %v75 = vsel %vm73, %v72, 0
  %vm77 = vcmask 1043456
  %v79 = vsel %vm77, %v67, 0
  %81 = vmatprep.subr.bf16.mxu0 0
  %82 = vmatpush1.bf16.msra.mxu0 0
  %83 = vmatprep.subr.bf16.mxu0 0
  %84 = vmatpush1.bf16.msra.mxu0 0
  %85 = vmatprep.subr.bf16.mxu0 0
  %86 = vmatpush1.bf16.msra.mxu0 0
  %87 = vmatprep.subr.bf16.mxu0 0
  %88 = vmatpush1.bf16.msra.mxu0 0
  %89 = vmatprep.subr.bf16.mxu0 0
  %90 = vmatpush1.bf16.msra.mxu0 0
  %91 = vmatprep.subr.bf16.mxu0 0
  %92 = vmatpush1.bf16.msra.mxu0 0
  %93 = vmatprep.subr.bf16.mxu0 0
  %94 = vmatpush1.bf16.msra.mxu0 0
  %95 = vmatprep.subr.bf16.mxu0 0
  %96 = vmatpush1.bf16.msra.mxu0 %v79
  %97 = vmatprep.subr.bf16.mxu0 0
  %98 = vmatpush2.bf16.msra.mxu0 0
  %99 = vmatprep.subr.bf16.mxu0 0
  %100 = vmatpush2.bf16.msra.mxu0 0
  %101 = vmatprep.subr.bf16.mxu0 0
  %102 = vmatpush2.bf16.msra.mxu0 0
  %103 = vmatprep.subr.bf16.mxu0 0
  %104 = vmatpush2.bf16.msra.mxu0 0
  %105 = vmatprep.subr.bf16.mxu0 0
  %106 = vmatpush2.bf16.msra.mxu0 0
  %107 = vmatprep.subr.bf16.mxu0 0
  %108 = vmatpush2.bf16.msra.mxu0 0
  %109 = vmatprep.subr.bf16.mxu0 0
  %110 = vmatpush2.bf16.msra.mxu0 0
  %111 = vmatprep.subr.bf16.mxu0 0
  %112 = vmatpush2.bf16.msra.mxu0 0
  %113 = vmatprep.mubr.bf16.mxu0 0
  %114 = vmatmul.mubr.bf16.gmra.mxu0 %v75
  %v115 = vpop.f32.mrf.mxu0
  %v116 = vadd.f32 0.0, %v115
  %v117 = vpop.f32.mrf.mxu0
  %v118 = vpop.f32.mrf.mxu0
  %v119 = vadd.f32 0.0, %v118
  %v120 = vpop.f32.mrf.mxu0
  %121 = vdwg.mxu0
  %122 = vst [vmem:[%s4] sm:$0xff] %v116
  %123 = vst [vmem:[%s4 + $0x8] sm:$0xff] %v119
  // Predicated region
  $region18: #{transition_layer.1} parent=0 // pred_check
    _
  $region19: #{transition_layer.1} parent=0 // pred_check_branch
    %125 = sbr.rel (0) target = $region21
  $region20: #{transition_layer.1} parent=0 // pred_region
    _
  $region21: #{transition_layer.1} parent=0 // pred_fallthru
    _
  // Predicated region
  $region22: #{transition_layer.1} parent=0 // pred_check
    _
  $region23: #{transition_layer.1} parent=0 // pred_check_branch
    %127 = sbr.rel (0) target = $region25
  $region24: #{transition_layer.1} parent=0 // pred_region
    _
  $region25: #{transition_layer.1} parent=0 // pred_fallthru
    _

</llo_original>
